<compile_context>
chip_gen: v7x
topology: tpu7x:2x2x1
jax: 0.10.0
libtpu: 0.0.40
codegen_flags: <defaults>
</compile_context>

<pallas_src>
from functools import partial

import numpy as np
import jax
import jax.numpy as jnp
from jax.experimental import pallas as pl
from jax.experimental.pallas import tpu as pltpu

HIDDEN = 128  # hidden_layer in the PyTorch module


def _round_up(v, m):
    return ((v + m - 1) // m) * m


def _mlp_kernel(x_ref, w1_ref, b1_ref, wh_ref, bh_ref, out_ref):
    # h = relu(x @ W1 + b1)  -- bias added in-kernel (VPU slot has huge slack).
    h = jnp.dot(x_ref[...], w1_ref[...], preferred_element_type=jnp.float32)
    h = jnp.maximum(h + b1_ref[...], 0.0)
    # Fused action/value heads: one (tile_b, head_w) matmul + packed bias add.
    out_ref[...] = (
        jnp.dot(h, wh_ref[...], preferred_element_type=jnp.float32) + bh_ref[...]
    )


def pack_params(w1, b1, wa, ba, wv, bv, head_w=None):
    """Pack raw (in, out)-layout params into the fused kernel layout.

    w1: (in_dim, HIDDEN), b1: (1, HIDDEN) or (HIDDEN,)
    wa: (HIDDEN, out_dim), ba: (out_dim,)-ish
    wv: (HIDDEN, 1),       bv: (1,)-ish
    head_w: fused head width; defaults to round_up(out_dim + 1, 8) (throughput
            path).  Use head_w=128 for the single-sample latency path.
    Returns (w1 (in_dim, HIDDEN), b1 (1, HIDDEN), wh (HIDDEN, head_w),
             bh (1, head_w)), all float32.
    """
    in_dim, hidden = w1.shape
    assert hidden == HIDDEN
    out_dim = wa.shape[1]
    if head_w is None:
        head_w = max(8, _round_up(out_dim + 1, 8))
    assert out_dim + 1 <= head_w

    w1 = w1.astype(jnp.float32)
    b1 = jnp.reshape(b1, (1, hidden)).astype(jnp.float32)

    wh = jnp.zeros((hidden, head_w), jnp.float32)
    wh = wh.at[:, :out_dim].set(wa.astype(jnp.float32))
    wh = wh.at[:, out_dim:out_dim + 1].set(wv.astype(jnp.float32))

    bh = jnp.zeros((1, head_w), jnp.float32)
    bh = bh.at[:, :out_dim].set(jnp.reshape(ba, (1, out_dim)).astype(jnp.float32))
    bh = bh.at[:, out_dim:out_dim + 1].set(jnp.reshape(bv, (1, 1)).astype(jnp.float32))
    return w1, b1, wh, bh


def _choose_tile_b(b):
    """Batch tile: small batches run as one full-extent block; large batches use
    512-2048-row tiles (multiple of 8) while keeping >= 2-4 grid steps so v7x's
    two TensorCores both get work via the 'parallel' grid axis."""
    if b <= 256:
        return b
    tile_b = min(2048, max(512, _round_up(pl.cdiv(b, 4), 8)))
    if tile_b >= b:
        return b  # single full-extent block; no ragged handling needed
    return tile_b


def _fused_forward(x2, w1, b1, wh, bh):
    """x2: (B, in_dim) f32 -> fused (B, head_w) head output."""
    b, in_dim = x2.shape
    hidden = w1.shape[1]
    head_w = wh.shape[1]

    tile_b = _choose_tile_b(b)
    grid = pl.cdiv(b, tile_b)  # ragged last block handled by Pallas; no jnp.pad

    out = pl.pallas_call(
        _mlp_kernel,
        out_shape=jax.ShapeDtypeStruct((b, head_w), jnp.float32),
        grid=(grid,),
        in_specs=[
            pl.BlockSpec((tile_b, in_dim), lambda i: (i, 0)),   # x tile
            pl.BlockSpec((in_dim, hidden), lambda i: (0, 0)),   # W1 (resident)
            pl.BlockSpec((1, hidden), lambda i: (0, 0)),        # b1 (resident)
            pl.BlockSpec((hidden, head_w), lambda i: (0, 0)),   # fused head W
            pl.BlockSpec((1, head_w), lambda i: (0, 0)),        # packed head bias
        ],
        out_specs=pl.BlockSpec((tile_b, head_w), lambda i: (i, 0)),
        compiler_params=pltpu.CompilerParams(
            dimension_semantics=("parallel",)),
    )(x2, w1, b1, wh, bh)
    return out


def mlp_forward(x, w1, b1, wh, bh, out_dim):
    """Exact semantics of MLP.forward: x.view(1, -1) -> (action_scores, state_values)."""
    x2 = jnp.reshape(x, (1, -1)).astype(jnp.float32)
    fused = _fused_forward(x2, w1, b1, wh, bh)          # (1, head_w) slab
    action_scores = fused[:, :out_dim]                  # (1, out_dim)
    state_values = fused[:, out_dim:out_dim + 1]        # (1, 1)
    return action_scores, state_values


def mlp_forward_batched(xs, w1, b1, wh, bh, out_dim):
    """Batched variant: xs (B, in_dim) -> (action_scores (B, out_dim), state_values (B, 1))."""
    xs = xs.astype(jnp.float32)
    fused = _fused_forward(xs, w1, b1, wh, bh)
    return fused[:, :out_dim], fused[:, out_dim:out_dim + 1]


def init_params(key, in_dim, hidden, out_dim):
    """Orthogonal init with gain sqrt(2) (like nn.init.orthogonal_), zero bias."""
    k1, k2, k3 = jax.random.split(key, 3)
    orth = jax.nn.initializers.orthogonal(scale=float(np.sqrt(2.0)))
    # PyTorch Linear weights are (out, in); build that way then transpose to the
    # kernel's row-major (in, out) layout so semantics match exactly.
    w1_t = orth(k1, (hidden, in_dim), jnp.float32)      # affine1.weight
    wa_t = orth(k2, (out_dim, hidden), jnp.float32)     # action_head.weight
    wv_t = orth(k3, (1, hidden), jnp.float32)           # value_head.weight
    w1 = jnp.transpose(w1_t)                            # (in_dim, hidden)
    wa = jnp.transpose(wa_t)                            # (hidden, out_dim)
    wv = jnp.transpose(wv_t)                            # (hidden, 1)
    b1 = jnp.zeros((1, hidden), jnp.float32)
    ba = jnp.zeros((1, out_dim), jnp.float32)
    bv = jnp.zeros((1, 1), jnp.float32)
    return w1, b1, wa, ba, wv, bv


if __name__ == "__main__":
    # Small, shape-consistent example: state dim 16, 4 actions, hidden 128.
    in_dim, hidden, out_dim = 16, HIDDEN, 4

    key = jax.random.PRNGKey(0)
    kx, kb, kp = jax.random.split(key, 3)
    x = jax.random.normal(kx, (in_dim,), dtype=jnp.float32)        # single env state
    xs = jax.random.normal(kb, (600, in_dim), dtype=jnp.float32)   # rollout batch
    w1, b1, wa, ba, wv, bv = init_params(kp, in_dim, hidden, out_dim)

    # Latency path: 128-lane head slab (unmasked stores, trivial traffic at B=1).
    p_small = pack_params(w1, b1, wa, ba, wv, bv, head_w=128)
    # Throughput path: minimal full-extent head width (round_up(out_dim+1, 8)).
    p_big = pack_params(w1, b1, wa, ba, wv, bv)

    fwd_single = jax.jit(partial(mlp_forward, out_dim=out_dim))
    fwd_batched = jax.jit(partial(mlp_forward_batched, out_dim=out_dim))

    # --- single-sample path (module semantics) ---
    action_scores, state_values = fwd_single(x, *p_small)
    jax.block_until_ready((action_scores, state_values))
    assert action_scores.shape == (1, out_dim)
    assert state_values.shape == (1, 1)

    # Pure-JAX reference.
    x2 = x.reshape(1, -1)
    h_ref = jnp.maximum(x2 @ w1 + b1, 0.0)
    act_ref = h_ref @ wa + ba
    val_ref = h_ref @ wv + bv
    np.testing.assert_allclose(np.asarray(action_scores), np.asarray(act_ref),
                               rtol=1e-5, atol=1e-5)
    np.testing.assert_allclose(np.asarray(state_values), np.asarray(val_ref),
                               rtol=1e-5, atol=1e-5)

    # --- batched path (exercises multi-step grid + ragged last block) ---
    act_b, val_b = fwd_batched(xs, *p_big)
    jax.block_until_ready((act_b, val_b))
    assert act_b.shape == (600, out_dim)
    assert val_b.shape == (600, 1)
    hb_ref = jnp.maximum(xs @ w1 + b1, 0.0)
    np.testing.assert_allclose(np.asarray(act_b), np.asarray(hb_ref @ wa + ba),
                               rtol=1e-5, atol=1e-5)
    np.testing.assert_allclose(np.asarray(val_b), np.asarray(hb_ref @ wv + bv),
                               rtol=1e-5, atol=1e-5)

    print("KERNEL_OK")
</pallas_src>

<mosaic_0001>
module attributes {stable_mosaic.version = 11 : i64} {
  func.func @_mlp_kernel(%arg0: i32, %arg1: memref<1x16xf32, #tpu.memory_space<vmem>>, %arg2: memref<16x128xf32, #tpu.memory_space<vmem>>, %arg3: memref<1x128xf32, #tpu.memory_space<vmem>>, %arg4: memref<128x128xf32, #tpu.memory_space<vmem>>, %arg5: memref<1x128xf32, #tpu.memory_space<vmem>>, %arg6: memref<1x128xf32, #tpu.memory_space<vmem>>) attributes {dimension_semantics = [#tpu.dimension_semantics<parallel>], iteration_bounds = array<i64: 1>, scalar_prefetch = 0 : i64, scratch_operands = 0 : i64, tpu.core_type = #tpu.core_type<tc>, window_params = [{transform_indices = @transform_0, window_bounds = array<i64: 1, 16>}, {pipeline_mode = #tpu.pipeline_mode<synchronous>, transform_indices = @transform_1, window_bounds = array<i64: 16, 128>}, {pipeline_mode = #tpu.pipeline_mode<synchronous>, transform_indices = @transform_2, window_bounds = array<i64: 1, 128>}, {pipeline_mode = #tpu.pipeline_mode<synchronous>, transform_indices = @transform_3, window_bounds = array<i64: 128, 128>}, {pipeline_mode = #tpu.pipeline_mode<synchronous>, transform_indices = @transform_4, window_bounds = array<i64: 1, 128>}, {transform_indices = @transform_5, window_bounds = array<i64: 1, 128>}]} {
    %c0 = arith.constant 0 : index
    %c0_0 = arith.constant 0 : index
    %0 = vector.load %arg1[%c0, %c0_0] : memref<1x16xf32, #tpu.memory_space<vmem>>, vector<1x16xf32>
    %c0_1 = arith.constant 0 : index
    %c0_2 = arith.constant 0 : index
    %1 = vector.load %arg2[%c0_1, %c0_2] : memref<16x128xf32, #tpu.memory_space<vmem>>, vector<16x128xf32>
    %cst = arith.constant dense<0.000000e+00> : vector<1x128xf32>
    %2 = tpu.matmul %0, %1, %cst {dimension_numbers = #tpu.dot_dimension_numbers<[1], [0], [0], [1], [0, 0, 1, 1], [], []>} : vector<1x16xf32>, vector<16x128xf32>, vector<1x128xf32> -> vector<1x128xf32>
    %c0_3 = arith.constant 0 : index
    %c0_4 = arith.constant 0 : index
    %3 = vector.load %arg3[%c0_3, %c0_4] : memref<1x128xf32, #tpu.memory_space<vmem>>, vector<1x128xf32>
    %4 = arith.addf %2, %3 : vector<1x128xf32>
    %cst_5 = arith.constant 0.000000e+00 : f32
    %5 = vector.broadcast %cst_5 : f32 to vector<1x128xf32>
    %6 = arith.maximumf %4, %5 : vector<1x128xf32>
    %c0_6 = arith.constant 0 : index
    %c0_7 = arith.constant 0 : index
    %7 = vector.load %arg4[%c0_6, %c0_7] : memref<128x128xf32, #tpu.memory_space<vmem>>, vector<128x128xf32>
    %cst_8 = arith.constant dense<0.000000e+00> : vector<1x128xf32>
    %8 = tpu.matmul %6, %7, %cst_8 {dimension_numbers = #tpu.dot_dimension_numbers<[1], [0], [0], [1], [0, 0, 1, 1], [], []>} : vector<1x128xf32>, vector<128x128xf32>, vector<1x128xf32> -> vector<1x128xf32>
    %c0_9 = arith.constant 0 : index
    %c0_10 = arith.constant 0 : index
    %9 = vector.load %arg5[%c0_9, %c0_10] : memref<1x128xf32, #tpu.memory_space<vmem>>, vector<1x128xf32>
    %10 = arith.addf %8, %9 : vector<1x128xf32>
    %c0_11 = arith.constant 0 : index
    %c0_12 = arith.constant 0 : index
    %11 = vector.load %arg6[%c0_11, %c0_12] : memref<1x128xf32, #tpu.memory_space<vmem>>, vector<1x128xf32>
    tpu.vector_store %arg6[%c0_11, %c0_12], %10 {strides = array<i32>} : memref<1x128xf32, #tpu.memory_space<vmem>>, vector<1x128xf32>,
    return
  }
  func.func @transform_0(%arg0: i32) -> (i32, i32) {
    %c0_i32 = arith.constant 0 : i32
    %c0_i32_0 = arith.constant 0 : i32
    return %arg0, %c0_i32 : i32, i32
  }
  func.func @transform_1(%arg0: i32) -> (i32, i32) {
    %c0_i32 = arith.constant 0 : i32
    %c0_i32_0 = arith.constant 0 : i32
    %c0_i32_1 = arith.constant 0 : i32
    return %c0_i32, %c0_i32_0 : i32, i32
  }
  func.func @transform_2(%arg0: i32) -> (i32, i32) {
    %c0_i32 = arith.constant 0 : i32
    %c0_i32_0 = arith.constant 0 : i32
    %c0_i32_1 = arith.constant 0 : i32
    return %c0_i32, %c0_i32_0 : i32, i32
  }
  func.func @transform_3(%arg0: i32) -> (i32, i32) {
    %c0_i32 = arith.constant 0 : i32
    %c0_i32_0 = arith.constant 0 : i32
    %c0_i32_1 = arith.constant 0 : i32
    return %c0_i32, %c0_i32_0 : i32, i32
  }
  func.func @transform_4(%arg0: i32) -> (i32, i32) {
    %c0_i32 = arith.constant 0 : i32
    %c0_i32_0 = arith.constant 0 : i32
    %c0_i32_1 = arith.constant 0 : i32
    return %c0_i32, %c0_i32_0 : i32, i32
  }
  func.func @transform_5(%arg0: i32) -> (i32, i32) {
    %c0_i32 = arith.constant 0 : i32
    %c0_i32_0 = arith.constant 0 : i32
    return %arg0, %c0_i32 : i32, i32
  }
}

</mosaic_0001>

<llo_original>
// kernel: mlp_forward.1
$region0: #{mlp_forward.1}
  #allocation0 [shape = 'u32[]', space=smem, size = 0x4, offset = 0x4, fixed_abs, tag = 'smem constant byte address 0x4 - core index']
  #allocation1 [shape = 'u32[144,128]{1,0:T(1,128)}', space=vmem, size = 0x12000, scoped, tag = 'internal scratch']
  %s0 = inlined_call_operand.vmem [shape: f32[1,16], index: 0, kind: input, shape index: {}]
  %s1 = inlined_call_operand.hbm [shape: f32[16,128], index: 1, kind: input, shape index: {}]
  %s2 = inlined_call_operand.vmem [shape: f32[1,128], index: 2, kind: input, shape index: {}]
  %s3 = inlined_call_operand.hbm [shape: f32[128,128], index: 3, kind: input, shape index: {}]
  %s4 = inlined_call_operand.vmem [shape: f32[1,128], index: 4, kind: input, shape index: {}]
  %s5 = inlined_call_operand.vmem [shape: f32[1,128], index: 5, kind: output, shape index: {}]
  %s6 = sld [smem:[#allocation0]]
  $region38: #{mlp_forward.1} parent=0
    _
  %s8 = ssub.s32 1, %s6
  %s9 = scalar_select 0, %s8, %s6
  $region1: #{mlp_forward.1} parent=0
    #allocation2 [shape = 'u8[8192]{0}', space=vmem, size = 0x2000, scoped, tag = 'input window, operand 1, single buffered']
    #allocation3 [shape = 's32[1]{0}', space=sflag, size = 0x4, scoped, tag = 'scoped memory for mlp_forward.1']
    #allocation4 [shape = 'u8[65536]{0}', space=vmem, size = 0x10000, scoped, tag = 'input window, operand 3, single buffered']
    #allocation5 [shape = 's32[1]{0}', space=sflag, size = 0x4, scoped, tag = 'scoped memory for mlp_forward.1']
    %10 = vsyncpa [#allocation3], 0
    %11 = vsyncpa [#allocation5], 0
    // Predicated region
    $region2: #{mlp_forward.1} parent=1 // pred_check
      _
    $region3: #{mlp_forward.1} parent=1 // pred_check_branch
      %13 = sbr.rel (0) target = $region5
    $region4: #{mlp_forward.1} parent=1 // pred_region
      _
    $region5: #{mlp_forward.1} parent=1 // pred_fallthru
      _
    // Predicated region
    $region6: #{mlp_forward.1} parent=1 // pred_check
      _
    $region7: #{mlp_forward.1} parent=1 // pred_check_branch
      %15 = sbr.rel (0) target = $region9
    $region8: #{mlp_forward.1} parent=1 // pred_region
      %s17 = ssub.s32 256, 256
      %18 = vsyncadd [#allocation3], %s17
      %s19 = sshll.u32 [#allocation2], 4
      %s20 = int_to_ptr.vmem [resolvable:$true] %s19
      %25 = dma.hbm_to_vmem [thread:$0]  %s1, 256, %s20, [#allocation3], 128, 128, 8
    $region9: #{mlp_forward.1} parent=1 // pred_fallthru
      _
    // Predicated region
    $region10: #{mlp_forward.1} parent=1 // pred_check
      _
    $region11: #{mlp_forward.1} parent=1 // pred_check_branch
      %27 = sbr.rel (0) target = $region13
    $region12: #{mlp_forward.1} parent=1 // pred_region
      _
    $region13: #{mlp_forward.1} parent=1 // pred_fallthru
      _
    // Predicated region
    $region14: #{mlp_forward.1} parent=1 // pred_check
      _
    $region15: #{mlp_forward.1} parent=1 // pred_check_branch
      %29 = sbr.rel (0) target = $region17
    $region16: #{mlp_forward.1} parent=1 // pred_region
      %s31 = ssub.s32 2048, 2048
      %32 = vsyncadd [#allocation5], %s31
      %s33 = sshll.u32 [#allocation4], 4
      %s34 = int_to_ptr.vmem [resolvable:$true] %s33
      %39 = dma.hbm_to_vmem [thread:$0]  %s3, 2048, %s34, [#allocation5], 128, 128, 8
    $region17: #{mlp_forward.1} parent=1 // pred_fallthru
      _
    // Predicated region
    $region18: #{mlp_forward.1} parent=1 // pred_check
      _
    $region19: #{mlp_forward.1} parent=1 // pred_check_branch
      %41 = sbr.rel (0) target = $region21
    $region20: #{mlp_forward.1} parent=1 // pred_region
      _
    $region21: #{mlp_forward.1} parent=1 // pred_fallthru
      _
    // Predicated region
    $region22: #{mlp_forward.1} parent=1 // pred_check
      _
    $region23: #{mlp_forward.1} parent=1 // pred_check_branch
      %43 = sbr.rel (0) target = $region25
    $region24: #{mlp_forward.1} parent=1 // pred_region
      %44 = dma.done [#allocation3], 256
    $region25: #{mlp_forward.1} parent=1 // pred_fallthru
      _
    // Predicated region
    $region26: #{mlp_forward.1} parent=1 // pred_check
      _
    $region27: #{mlp_forward.1} parent=1 // pred_check_branch
      %46 = sbr.rel (0) target = $region29
    $region28: #{mlp_forward.1} parent=1 // pred_region
      %47 = dma.done [#allocation5], 2048
    $region29: #{mlp_forward.1} parent=1 // pred_fallthru
      _
    %v48 = vld [vmem:[%s0] sm:$0x1]
    %v49 = vld [vmem:[#allocation2] sm:$0xff]
    %v50 = vld [vmem:[#allocation2 + $0x8] sm:$0xff]
    %v51 = vld [vmem:[%s2] sm:$0x1]
    %vm52 = vcmask 130048
    %v54 = vsel %vm52, %v48, 0
    %56 = vmatprep.subr.mxu0 0.0
    %57 = vmatpush1.msra.mxu0 %v49
    %58 = vmatprep.subr.mxu0 0.0
    %59 = vmatpush1.msra.mxu0 %v50
    %60 = vmatprep.subr.mxu0 0.0
    %61 = vmatpush1.msra.mxu0 0.0
    %62 = vmatprep.subr.mxu0 0.0
    %63 = vmatpush1.msra.mxu0 0.0
    %64 = vmatprep.subr.mxu0 0.0
    %65 = vmatpush1.msra.mxu0 0.0
    %66 = vmatprep.subr.mxu0 0.0
    %67 = vmatpush1.msra.mxu0 0.0
    %68 = vmatprep.subr.mxu0 0.0
    %69 = vmatpush1.msra.mxu0 0.0
    %70 = vmatprep.subr.mxu0 0.0
    %71 = vmatpush1.msra.mxu0 0.0
    %72 = vmatprep.subr.mxu0 0.0
    %73 = vmatpush1.msra.mxu0 0.0
    %74 = vmatprep.subr.mxu0 0.0
    %75 = vmatpush1.msra.mxu0 0.0
    %76 = vmatprep.subr.mxu0 0.0
    %77 = vmatpush1.msra.mxu0 0.0
    %78 = vmatprep.subr.mxu0 0.0
    %79 = vmatpush1.msra.mxu0 0.0
    %80 = vmatprep.subr.mxu0 0.0
    %81 = vmatpush1.msra.mxu0 0.0
    %82 = vmatprep.subr.mxu0 0.0
    %83 = vmatpush1.msra.mxu0 0.0
    %84 = vmatprep.subr.mxu0 0.0
    %85 = vmatpush1.msra.mxu0 0.0
    %86 = vmatprep.subr.mxu0 0.0
    %87 = vmatpush1.msra.mxu0 0.0
    %88 = vmatprep.subr.mxu0 0.0
    %89 = vmatpush1.msra.mxu0 0.0
    %90 = vmatprep.subr.mxu0 0.0
    %91 = vmatpush1.msra.mxu0 0.0
    %92 = vmatprep.subr.mxu0 0.0
    %93 = vmatpush1.msra.mxu0 0.0
    %94 = vmatprep.subr.mxu0 0.0
    %95 = vmatpush1.msra.mxu0 0.0
    %96 = vmatprep.subr.mxu0 0.0
    %97 = vmatpush1.msra.mxu0 0.0
    %98 = vmatprep.subr.mxu0 0.0
    %99 = vmatpush1.msra.mxu0 0.0
    %100 = vmatprep.subr.mxu0 0.0
    %101 = vmatpush1.msra.mxu0 0.0
    %102 = vmatprep.subr.mxu0 0.0
    %103 = vmatpush1.msra.mxu0 0.0
    %104 = vmatprep.subr.mxu0 0.0
    %105 = vmatpush1.msra.mxu0 0.0
    %106 = vmatprep.subr.mxu0 0.0
    %107 = vmatpush1.msra.mxu0 0.0
    %108 = vmatprep.subr.mxu0 0.0
    %109 = vmatpush1.msra.mxu0 0.0
    %110 = vmatprep.subr.mxu0 0.0
    %111 = vmatpush1.msra.mxu0 0.0
    %112 = vmatprep.subr.mxu0 0.0
    %113 = vmatpush1.msra.mxu0 0.0
    %114 = vmatprep.subr.mxu0 0.0
    %115 = vmatpush1.msra.mxu0 0.0
    %116 = vmatprep.subr.mxu0 0.0
    %117 = vmatpush1.msra.mxu0 0.0
    %118 = vmatprep.subr.mxu0 0.0
    %119 = vmatpush1.msra.mxu0 0.0
    %120 = vmatprep.mubr.f32.mxu0 0.0
    %121 = vmatmul.mubr.f32.gmra.mrb[0].mxu0 %v54
    %v122 = vpop.f32.mrb[0].mxu0
    %v123 = vadd.f32 %v51, %v122
    %v124 = vpop.f32.mrb[0].mxu0
    %125 = vdwg.mxu0
    %v126 = vmax.f32 %v123, 0.0
    %v127 = vld [vmem:[#allocation4] sm:$0xff]
    %v128 = vld [vmem:[#allocation4 + $0x8] sm:$0xff]
    %v129 = vld [vmem:[#allocation4 + $0x10] sm:$0xff]
    %v130 = vld [vmem:[#allocation4 + $0x18] sm:$0xff]
    %v131 = vld [vmem:[#allocation4 + $0x20] sm:$0xff]
    %v132 = vld [vmem:[#allocation4 + $0x28] sm:$0xff]
    %v133 = vld [vmem:[#allocation4 + $0x30] sm:$0xff]
    %v134 = vld [vmem:[#allocation4 + $0x38] sm:$0xff]
    %v135 = vld [vmem:[#allocation4 + $0x40] sm:$0xff]
    %v136 = vld [vmem:[#allocation4 + $0x48] sm:$0xff]
    %v137 = vld [vmem:[#allocation4 + $0x50] sm:$0xff]
    %v138 = vld [vmem:[#allocation4 + $0x58] sm:$0xff]
    %v139 = vld [vmem:[#allocation4 + $0x60] sm:$0xff]
    %v140 = vld [vmem:[#allocation4 + $0x68] sm:$0xff]
    %v141 = vld [vmem:[#allocation4 + $0x70] sm:$0xff]
    %v142 = vld [vmem:[#allocation4 + $0x78] sm:$0xff]
    %v143 = vld [vmem:[%s4] sm:$0x1]
    %144 = vmatprep.subr.mxu0 0.0
    %145 = vmatpush1.msra.mxu0 %v127
    %146 = vmatprep.subr.mxu0 0.0
    %147 = vmatpush1.msra.mxu0 %v128
    %148 = vmatprep.subr.mxu0 0.0
    %149 = vmatpush1.msra.mxu0 %v129
    %150 = vmatprep.subr.mxu0 0.0
    %151 = vmatpush1.msra.mxu0 %v130
    %152 = vmatprep.subr.mxu0 0.0
    %153 = vmatpush1.msra.mxu0 %v131
    %154 = vmatprep.subr.mxu0 0.0
    %155 = vmatpush1.msra.mxu0 %v132
    %156 = vmatprep.subr.mxu0 0.0
    %157 = vmatpush1.msra.mxu0 %v133
    %158 = vmatprep.subr.mxu0 0.0
    %159 = vmatpush1.msra.mxu0 %v134
    %160 = vmatprep.subr.mxu0 0.0
    %161 = vmatpush1.msra.mxu0 %v135
    %162 = vmatprep.subr.mxu0 0.0
    %163 = vmatpush1.msra.mxu0 %v136
    %164 = vmatprep.subr.mxu0 0.0
    %165 = vmatpush1.msra.mxu0 %v137
    %166 = vmatprep.subr.mxu0 0.0
    %167 = vmatpush1.msra.mxu0 %v138
    %168 = vmatprep.subr.mxu0 0.0
    %169 = vmatpush1.msra.mxu0 %v139
    %170 = vmatprep.subr.mxu0 0.0
    %171 = vmatpush1.msra.mxu0 %v140
    %172 = vmatprep.subr.mxu0 0.0
    %173 = vmatpush1.msra.mxu0 %v141
    %174 = vmatprep.subr.mxu0 0.0
    %175 = vmatpush1.msra.mxu0 %v142
    %176 = vmatprep.subr.mxu0 0.0
    %177 = vmatpush1.msra.mxu0 0.0
    %178 = vmatprep.subr.mxu0 0.0
    %179 = vmatpush1.msra.mxu0 0.0
    %180 = vmatprep.subr.mxu0 0.0
    %181 = vmatpush1.msra.mxu0 0.0
    %182 = vmatprep.subr.mxu0 0.0
    %183 = vmatpush1.msra.mxu0 0.0
    %184 = vmatprep.subr.mxu0 0.0
    %185 = vmatpush1.msra.mxu0 0.0
    %186 = vmatprep.subr.mxu0 0.0
    %187 = vmatpush1.msra.mxu0 0.0
    %188 = vmatprep.subr.mxu0 0.0
    %189 = vmatpush1.msra.mxu0 0.0
    %190 = vmatprep.subr.mxu0 0.0
    %191 = vmatpush1.msra.mxu0 0.0
    %192 = vmatprep.subr.mxu0 0.0
    %193 = vmatpush1.msra.mxu0 0.0
    %194 = vmatprep.subr.mxu0 0.0
    %195 = vmatpush1.msra.mxu0 0.0
    %196 = vmatprep.subr.mxu0 0.0
    %197 = vmatpush1.msra.mxu0 0.0
    %198 = vmatprep.subr.mxu0 0.0
    %199 = vmatpush1.msra.mxu0 0.0
    %200 = vmatprep.subr.mxu0 0.0
    %201 = vmatpush1.msra.mxu0 0.0
    %202 = vmatprep.subr.mxu0 0.0
    %203 = vmatpush1.msra.mxu0 0.0
    %204 = vmatprep.subr.mxu0 0.0
    %205 = vmatpush1.msra.mxu0 0.0
    %206 = vmatprep.subr.mxu0 0.0
    %207 = vmatpush1.msra.mxu0 0.0
    %208 = vmatprep.mubr.f32.mxu0 0.0
    %209 = vmatmul.mubr.f32.gmra.mrb[0].mxu0 %v126
    %v210 = vpop.f32.mrb[0].mxu0
    %v211 = vadd.f32 %v143, %v210
    %v212 = vpop.f32.mrb[0].mxu0
    %213 = vdwg.mxu0
    %214 = vst [vmem:[%s5] sm:$0x1] %v211
    // Predicated region
    $region30: #{mlp_forward.1} parent=1 // pred_check
      _
    $region31: #{mlp_forward.1} parent=1 // pred_check_branch
      %216 = sbr.rel (0) target = $region33
    $region32: #{mlp_forward.1} parent=1 // pred_region
      _
    $region33: #{mlp_forward.1} parent=1 // pred_fallthru
      _
    // Predicated region
    $region34: #{mlp_forward.1} parent=1 // pred_check
      _
    $region35: #{mlp_forward.1} parent=1 // pred_check_branch
      %218 = sbr.rel (0) target = $region37
    $region36: #{mlp_forward.1} parent=1 // pred_region
      _
    $region37: #{mlp_forward.1} parent=1 // pred_fallthru
      _
    %219 = vsyncpa [#allocation3], 1
    %220 = vsyncpa [#allocation5], 1

</llo_original>
